<compile_context>
chip_gen: v7x
topology: tpu7x:2x2x1
jax: 0.10.0
libtpu: 0.0.40
codegen_flags: <defaults>
</compile_context>

<pallas_src>
import jax
import jax.numpy as jnp
from jax.experimental import pallas as pl
from jax.experimental.pallas import tpu as pltpu

NEG_SLOPE = 0.2   # LeakyReLU slope
K = 4             # kernel_size
STRIDE = 2
PAD = 1
BN_EPS = 1e-5
VMEM_LIMIT = 32 * 1024 * 1024   # explicit scoped-VMEM budget (v5e default is 16 MiB)


# ----------------------------- Pallas kernels ------------------------------ #

def _convtrans_up_kernel(x_ref, m_ref, scale_ref, shift_ref, o_ref, lbuf):
    """One batch element, NCHW in, phase-rows out.

    x_ref    : (1, Ci, H, W)            input (NCHW, unpadded)
    m_ref    : (2, 2, Ci*(W+2), Co*2W)  banded conv+interleave weight, [py, a]
    scale_ref: (1, Co*2W)               folded eval BN scale, per output column
    shift_ref: (1, Co*2W)               folded eval BN shift
    o_ref    : (1, 2, H, Co*2W)         out[0, py, m, o*2W+n] = y[o, 2m+py, n]
    lbuf     : VMEM (H+2, Ci*(W+2))     zero-padded, channel-concatenated slab
    """
    Ci, H, W = x_ref.shape[1], x_ref.shape[2], x_ref.shape[3]
    Wp = W + 2
    CW = o_ref.shape[3]                               # Co * 2W  (lane-dense)

    # LeakyReLU(0.2) on the raw input.
    x = x_ref[0]                                      # (Ci, H, W)
    xa = jnp.where(x > 0, x, NEG_SLOPE * x)

    # Build the padded slab in VMEM (halo handled here; no wrapper jnp.pad):
    #   lbuf[h, i*Wp + c] = xa[i, h-1, c-1] in the interior, 0 on the 1-px halo.
    lbuf[...] = jnp.zeros_like(lbuf)
    for i in range(Ci):
        lbuf[1:1 + H, i * Wp + 1: i * Wp + 1 + W] = xa[i]

    # Hoisted BN broadcast (eval-mode affine); Dropout in eval = identity.
    scale = jnp.broadcast_to(scale_ref[...], (H, CW))
    shift = jnp.broadcast_to(shift_ref[...], (H, CW))

    # Each output-row parity py: two fused matmuls (vertical taps a=0,1).
    # All horizontal taps, all input channels and the stride-2 column
    # interleave are already folded into m_ref -> contraction depth Ci*Wp,
    # output width Co*2W (128-lane dense).
    for py in range(2):
        acc = jnp.dot(lbuf[py: py + H, :], m_ref[py, 0],
                      preferred_element_type=jnp.float32)
        acc = acc + jnp.dot(lbuf[py + 1: py + 1 + H, :], m_ref[py, 1],
                            preferred_element_type=jnp.float32)
        o_ref[0, py] = (acc * scale + shift).astype(o_ref.dtype)


def _res_kernel(x_ref, scale_ref, shift_ref, o_ref):
    """block_type='res' (ctor default): LeakyReLU -> BN(eval) -> Dropout(eval=id).

    x_ref: (1, C, H*W) — spatial flattened into lanes (256-wide, lane-dense).
    """
    x = x_ref[0]                                      # (C, H*W)
    xa = jnp.where(x > 0, x, NEG_SLOPE * x)
    o_ref[0] = (xa * scale_ref[...] + shift_ref[...]).astype(o_ref.dtype)


# ------------------------------- JAX wrapper -------------------------------- #

def init_params(key, ic=4, oc=4):
    k1, k2, k3, k4, k5 = jax.random.split(key, 5)
    return dict(
        # nn.ConvTranspose2d weight shape: (in_channels, out_channels, kH, kW), bias=False
        w=0.1 * jax.random.normal(k1, (ic, oc, K, K), jnp.float32),
        gamma=1.0 + 0.1 * jax.random.normal(k2, (oc,), jnp.float32),
        beta=0.1 * jax.random.normal(k3, (oc,), jnp.float32),
        rm=0.1 * jax.random.normal(k4, (oc,), jnp.float32),
        rv=jnp.abs(1.0 + 0.1 * jax.random.normal(k5, (oc,), jnp.float32)),
    )


def _folded_bn(params):
    scale = params['gamma'] / jnp.sqrt(params['rv'] + BN_EPS)
    shift = params['beta'] - params['rm'] * scale
    return scale, shift                               # (C,), (C,)


def _build_banded_weights(w, W):
    """ConvTranspose2d weight (Ci, Co, 4, 4) -> banded matrices (2, 2, Ci*Wp, Co*2W).

    M[py, a][i*Wp + c, o*2W + nn] = w[i, o, 3 - py - 2a, nn + 3 - 2c]
    when 0 <= nn + 3 - 2c <= 3, else 0, so that with
    L_r[m, i*Wp + c] = LeakyReLU(x)_padded[i, m + r, c]:
        out[o, 2m+py, nn] = (L_py @ M[py,0] + L_{py+1} @ M[py,1])[m, o*2W + nn]
    i.e. the stride-2 transposed conv, its horizontal tap sum, the channel
    contraction and the output column interleave all become two matmuls.
    """
    Ci, Co = w.shape[0], w.shape[1]
    Wp = W + 2
    c = jnp.arange(Wp)
    nn = jnp.arange(2 * W)
    kx = nn[None, :] + 3 - 2 * c[:, None]             # (Wp, 2W)
    valid = (kx >= 0) & (kx <= 3)
    kxc = jnp.clip(kx, 0, 3)
    blocks = []
    for py in range(2):
        row = []
        for a in range(2):
            ky = 3 - py - 2 * a
            wk = w[:, :, ky, :][:, :, kxc]            # (Ci, Co, Wp, 2W)
            wk = jnp.where(valid[None, None], wk, 0.0)
            row.append(jnp.transpose(wk, (0, 2, 1, 3)).reshape(Ci * Wp, Co * 2 * W))
        blocks.append(jnp.stack(row))
    return jnp.stack(blocks)                          # (2, 2, Ci*Wp, Co*2W)


def conv_trans_forward(x_nchw, params, block_type='up'):
    scale, shift = _folded_bn(params)                 # (C,)
    x = x_nchw.astype(jnp.float32)
    N, Ci, H, W = x.shape

    if block_type == 'res':
        C = Ci
        xf = x.reshape(N, C, H * W)                   # free reshape, lane-dense blocks
        out = pl.pallas_call(
            _res_kernel,
            out_shape=jax.ShapeDtypeStruct((N, C, H * W), jnp.float32),
            grid=(N,),
            in_specs=[pl.BlockSpec((1, C, H * W), lambda n: (n, 0, 0)),
                      pl.BlockSpec((C, 1), lambda n: (0, 0)),
                      pl.BlockSpec((C, 1), lambda n: (0, 0))],
            out_specs=pl.BlockSpec((1, C, H * W), lambda n: (n, 0, 0)),
            compiler_params=pltpu.CompilerParams(
                dimension_semantics=("parallel",),
                vmem_limit_bytes=VMEM_LIMIT),
        )(xf, scale.reshape(C, 1), shift.reshape(C, 1))
        return out.reshape(N, C, H, W)

    if block_type == 'up':
        Co = params['w'].shape[1]
        Wp = W + 2
        CW = Co * 2 * W
        M = _build_banded_weights(params['w'], W)     # (2, 2, Ci*Wp, CW)
        scale_row = jnp.repeat(scale, 2 * W).reshape(1, CW)
        shift_row = jnp.repeat(shift, 2 * W).reshape(1, CW)

        out_k = pl.pallas_call(
            _convtrans_up_kernel,
            out_shape=jax.ShapeDtypeStruct((N, 2, H, CW), jnp.float32),
            grid=(N,),
            in_specs=[pl.BlockSpec((1, Ci, H, W), lambda n: (n, 0, 0, 0)),
                      pl.BlockSpec((2, 2, Ci * Wp, CW), lambda n: (0, 0, 0, 0)),
                      pl.BlockSpec((1, CW), lambda n: (0, 0)),
                      pl.BlockSpec((1, CW), lambda n: (0, 0))],
            out_specs=pl.BlockSpec((1, 2, H, CW), lambda n: (n, 0, 0, 0)),
            scratch_shapes=[pltpu.VMEM((H + 2, Ci * Wp), jnp.float32)],
            compiler_params=pltpu.CompilerParams(
                dimension_semantics=("parallel",),
                vmem_limit_bytes=VMEM_LIMIT),
        )(x, M, scale_row, shift_row)

        # (N, 2, H, Co*2W) -> (N, Co, 2H, 2W): free reshapes + ONE small transpose.
        out = out_k.reshape(N, 2, H, Co, 2 * W)
        out = jnp.transpose(out, (0, 3, 2, 1, 4)).reshape(N, Co, 2 * H, 2 * W)
        return out

    # TODO(synk): block_type='down' (strided Conv2d) not implemented.
    raise NotImplementedError(block_type)


# -------------------------- pure-JAX reference ------------------------------ #

def reference_up(x_nchw, params):
    x = jnp.transpose(x_nchw, (0, 2, 3, 1)).astype(jnp.float32)
    xa = jnp.where(x > 0, x, NEG_SLOPE * x)
    N, H, W, Ci = x.shape
    Wt = params['w']                                  # (Ci, Co, kH, kW)
    Co = Wt.shape[1]
    full = jnp.zeros((N, 2 * H + 2, 2 * W + 2, Co), jnp.float32)
    for ky in range(K):
        for kx in range(K):
            contrib = jnp.einsum('nhwi,io->nhwo', xa, Wt[:, :, ky, kx])
            full = full.at[:, ky:ky + 2 * H:2, kx:kx + 2 * W:2, :].add(contrib)
    out = full[:, PAD:-PAD, PAD:-PAD, :]              # crop output padding
    scale, shift = _folded_bn(params)
    out = out * scale + shift
    return jnp.transpose(out, (0, 3, 1, 2))


def reference_res(x_nchw, params):
    scale, shift = _folded_bn(params)
    x = x_nchw.astype(jnp.float32)
    xa = jnp.where(x > 0, x, NEG_SLOPE * x)
    return xa * scale[None, :, None, None] + shift[None, :, None, None]


# ---------------------------------- main ------------------------------------ #

if __name__ == "__main__":
    key = jax.random.PRNGKey(0)
    kx_, kp = jax.random.split(key)

    N, C, H, W = 2, 4, 16, 16
    x = jax.random.normal(kx_, (N, C, H, W), jnp.float32)
    params = init_params(kp, ic=C, oc=C)

    # 'up' variant (ConvTranspose2d path): 16x16 -> 32x32
    y_up = jax.block_until_ready(conv_trans_forward(x, params, block_type='up'))
    assert y_up.shape == (N, C, 2 * H, 2 * W), y_up.shape
    y_up_ref = reference_up(x, params)
    assert jnp.allclose(y_up, y_up_ref, atol=1e-4, rtol=1e-4), \
        float(jnp.max(jnp.abs(y_up - y_up_ref)))

    # 'res' variant (constructor default): elementwise path
    y_res = jax.block_until_ready(conv_trans_forward(x, params, block_type='res'))
    y_res_ref = reference_res(x, params)
    assert jnp.allclose(y_res, y_res_ref, atol=1e-5, rtol=1e-5)

    print("KERNEL_OK")
</pallas_src>

<mosaic_0001>
module attributes {stable_mosaic.version = 11 : i64} {
  func.func @_convtrans_up_kernel(%arg0: i32, %arg1: memref<1x4x16x16xf32, #tpu.memory_space<vmem>>, %arg2: memref<2x2x72x128xf32, #tpu.memory_space<vmem>>, %arg3: memref<1x128xf32, #tpu.memory_space<vmem>>, %arg4: memref<1x128xf32, #tpu.memory_space<vmem>>, %arg5: memref<1x2x16x128xf32, #tpu.memory_space<vmem>>, %arg6: memref<18x72xf32, #tpu.memory_space<vmem>>) attributes {dimension_semantics = [#tpu.dimension_semantics<parallel>], iteration_bounds = array<i64: 2>, scalar_prefetch = 0 : i64, scratch_operands = 1 : i64, tpu.core_type = #tpu.core_type<tc>, window_params = [{transform_indices = @transform_0, window_bounds = array<i64: 1, 4, 16, 16>}, {pipeline_mode = #tpu.pipeline_mode<synchronous>, transform_indices = @transform_1, window_bounds = array<i64: 2, 2, 72, 128>}, {pipeline_mode = #tpu.pipeline_mode<synchronous>, transform_indices = @transform_2, window_bounds = array<i64: 1, 128>}, {pipeline_mode = #tpu.pipeline_mode<synchronous>, transform_indices = @transform_3, window_bounds = array<i64: 1, 128>}, {transform_indices = @transform_4, window_bounds = array<i64: 1, 2, 16, 128>}]} {
    %c0 = arith.constant 0 : index
    %c0_0 = arith.constant 0 : index
    %c0_1 = arith.constant 0 : index
    %c0_2 = arith.constant 0 : index
    %0 = vector.load %arg1[%c0, %c0_0, %c0_1, %c0_2] : memref<1x4x16x16xf32, #tpu.memory_space<vmem>>, vector<1x4x16x16xf32>
    %1 = vector.shape_cast %0 : vector<1x4x16x16xf32> to vector<4x16x16xf32>
    %cst = arith.constant 0.000000e+00 : f32
    %2 = vector.broadcast %cst : f32 to vector<4x16x16xf32>
    %3 = arith.cmpf ogt, %1, %2 : vector<4x16x16xf32>
    %cst_3 = arith.constant 2.000000e-01 : f32
    %4 = vector.broadcast %cst_3 : f32 to vector<4x16x16xf32>
    %5 = arith.mulf %4, %1 : vector<4x16x16xf32>
    %6 = arith.select %3, %1, %5 : vector<4x16x16xi1>, vector<4x16x16xf32>
    %cst_4 = arith.constant 0.000000e+00 : f32
    %7 = vector.broadcast %cst_4 : f32 to vector<18x72xf32>
    %c0_5 = arith.constant 0 : index
    %c0_6 = arith.constant 0 : index
    %8 = vector.load %arg6[%c0_5, %c0_6] : memref<18x72xf32, #tpu.memory_space<vmem>>, vector<18x72xf32>
    tpu.vector_store %arg6[%c0_5, %c0_6], %7 {strides = array<i32>} : memref<18x72xf32, #tpu.memory_space<vmem>>, vector<18x72xf32>,
    %9 = vector.extract_strided_slice %6 {offsets = [0, 0, 0], sizes = [1, 16, 16], strides = [1, 1, 1]} : vector<4x16x16xf32> to vector<1x16x16xf32>
    %10 = vector.shape_cast %9 : vector<1x16x16xf32> to vector<16x16xf32>
    %c1 = arith.constant 1 : index
    %c1_7 = arith.constant 1 : index
    %11 = vector.load %arg6[%c1, %c1_7] : memref<18x72xf32, #tpu.memory_space<vmem>>, vector<16x16xf32>
    tpu.vector_store %arg6[%c1, %c1_7], %10 {strides = array<i32>} : memref<18x72xf32, #tpu.memory_space<vmem>>, vector<16x16xf32>,
    %12 = vector.extract_strided_slice %6 {offsets = [1, 0, 0], sizes = [1, 16, 16], strides = [1, 1, 1]} : vector<4x16x16xf32> to vector<1x16x16xf32>
    %13 = vector.shape_cast %12 : vector<1x16x16xf32> to vector<16x16xf32>
    %c1_8 = arith.constant 1 : index
    %c19 = arith.constant 19 : index
    %14 = vector.load %arg6[%c1_8, %c19] : memref<18x72xf32, #tpu.memory_space<vmem>>, vector<16x16xf32>
    tpu.vector_store %arg6[%c1_8, %c19], %13 {strides = array<i32>} : memref<18x72xf32, #tpu.memory_space<vmem>>, vector<16x16xf32>,
    %15 = vector.extract_strided_slice %6 {offsets = [2, 0, 0], sizes = [1, 16, 16], strides = [1, 1, 1]} : vector<4x16x16xf32> to vector<1x16x16xf32>
    %16 = vector.shape_cast %15 : vector<1x16x16xf32> to vector<16x16xf32>
    %c1_9 = arith.constant 1 : index
    %c37 = arith.constant 37 : index
    %17 = vector.load %arg6[%c1_9, %c37] : memref<18x72xf32, #tpu.memory_space<vmem>>, vector<16x16xf32>
    tpu.vector_store %arg6[%c1_9, %c37], %16 {strides = array<i32>} : memref<18x72xf32, #tpu.memory_space<vmem>>, vector<16x16xf32>,
    %18 = vector.extract_strided_slice %6 {offsets = [3, 0, 0], sizes = [1, 16, 16], strides = [1, 1, 1]} : vector<4x16x16xf32> to vector<1x16x16xf32>
    %19 = vector.shape_cast %18 : vector<1x16x16xf32> to vector<16x16xf32>
    %c1_10 = arith.constant 1 : index
    %c55 = arith.constant 55 : index
    %20 = vector.load %arg6[%c1_10, %c55] : memref<18x72xf32, #tpu.memory_space<vmem>>, vector<16x16xf32>
    tpu.vector_store %arg6[%c1_10, %c55], %19 {strides = array<i32>} : memref<18x72xf32, #tpu.memory_space<vmem>>, vector<16x16xf32>,
    %c0_11 = arith.constant 0 : index
    %c0_12 = arith.constant 0 : index
    %21 = vector.load %arg3[%c0_11, %c0_12] : memref<1x128xf32, #tpu.memory_space<vmem>>, vector<1x128xf32>
    %22 = vector.shape_cast %21 : vector<1x128xf32> to vector<1x128xf32>
    %23 = vector.broadcast %22 : vector<1x128xf32> to vector<16x128xf32>
    %c0_13 = arith.constant 0 : index
    %c0_14 = arith.constant 0 : index
    %24 = vector.load %arg4[%c0_13, %c0_14] : memref<1x128xf32, #tpu.memory_space<vmem>>, vector<1x128xf32>
    %25 = vector.shape_cast %24 : vector<1x128xf32> to vector<1x128xf32>
    %26 = vector.broadcast %25 : vector<1x128xf32> to vector<16x128xf32>
    %c0_15 = arith.constant 0 : index
    %c0_16 = arith.constant 0 : index
    %27 = vector.load %arg6[%c0_15, %c0_16] : memref<18x72xf32, #tpu.memory_space<vmem>>, vector<16x72xf32>
    %c0_17 = arith.constant 0 : index
    %c0_18 = arith.constant 0 : index
    %c0_19 = arith.constant 0 : index
    %c0_20 = arith.constant 0 : index
    %28 = vector.load %arg2[%c0_17, %c0_18, %c0_19, %c0_20] : memref<2x2x72x128xf32, #tpu.memory_space<vmem>>, vector<1x1x72x128xf32>
    %29 = vector.shape_cast %28 : vector<1x1x72x128xf32> to vector<72x128xf32>
    %cst_21 = arith.constant dense<0.000000e+00> : vector<16x128xf32>
    %30 = tpu.matmul %27, %29, %cst_21 {dimension_numbers = #tpu.dot_dimension_numbers<[1], [0], [0], [1], [0, 0, 1, 1], [], []>} : vector<16x72xf32>, vector<72x128xf32>, vector<16x128xf32> -> vector<16x128xf32>
    %c1_22 = arith.constant 1 : index
    %c0_23 = arith.constant 0 : index
    %31 = vector.load %arg6[%c1_22, %c0_23] : memref<18x72xf32, #tpu.memory_space<vmem>>, vector<16x72xf32>
    %c0_24 = arith.constant 0 : index
    %c1_25 = arith.constant 1 : index
    %c0_26 = arith.constant 0 : index
    %c0_27 = arith.constant 0 : index
    %32 = vector.load %arg2[%c0_24, %c1_25, %c0_26, %c0_27] : memref<2x2x72x128xf32, #tpu.memory_space<vmem>>, vector<1x1x72x128xf32>
    %33 = vector.shape_cast %32 : vector<1x1x72x128xf32> to vector<72x128xf32>
    %cst_28 = arith.constant dense<0.000000e+00> : vector<16x128xf32>
    %34 = tpu.matmul %31, %33, %cst_28 {dimension_numbers = #tpu.dot_dimension_numbers<[1], [0], [0], [1], [0, 0, 1, 1], [], []>} : vector<16x72xf32>, vector<72x128xf32>, vector<16x128xf32> -> vector<16x128xf32>
    %35 = arith.addf %30, %34 : vector<16x128xf32>
    %36 = arith.mulf %35, %23 : vector<16x128xf32>
    %37 = arith.addf %36, %26 : vector<16x128xf32>
    %c0_29 = arith.constant 0 : index
    %c0_30 = arith.constant 0 : index
    %c0_31 = arith.constant 0 : index
    %c0_32 = arith.constant 0 : index
    %38 = vector.load %arg5[%c0_29, %c0_30, %c0_31, %c0_32] : memref<1x2x16x128xf32, #tpu.memory_space<vmem>>, vector<1x1x16x128xf32>
    %39 = vector.shape_cast %38 : vector<1x1x16x128xf32> to vector<16x128xf32>
    %40 = vector.shape_cast %37 : vector<16x128xf32> to vector<1x1x16x128xf32>
    tpu.vector_store %arg5[%c0_29, %c0_30, %c0_31, %c0_32], %40 {strides = array<i32>} : memref<1x2x16x128xf32, #tpu.memory_space<vmem>>, vector<1x1x16x128xf32>,
    %c1_33 = arith.constant 1 : index
    %c0_34 = arith.constant 0 : index
    %41 = vector.load %arg6[%c1_33, %c0_34] : memref<18x72xf32, #tpu.memory_space<vmem>>, vector<16x72xf32>
    %c1_35 = arith.constant 1 : index
    %c0_36 = arith.constant 0 : index
    %c0_37 = arith.constant 0 : index
    %c0_38 = arith.constant 0 : index
    %42 = vector.load %arg2[%c1_35, %c0_36, %c0_37, %c0_38] : memref<2x2x72x128xf32, #tpu.memory_space<vmem>>, vector<1x1x72x128xf32>
    %43 = vector.shape_cast %42 : vector<1x1x72x128xf32> to vector<72x128xf32>
    %cst_39 = arith.constant dense<0.000000e+00> : vector<16x128xf32>
    %44 = tpu.matmul %41, %43, %cst_39 {dimension_numbers = #tpu.dot_dimension_numbers<[1], [0], [0], [1], [0, 0, 1, 1], [], []>} : vector<16x72xf32>, vector<72x128xf32>, vector<16x128xf32> -> vector<16x128xf32>
    %c2 = arith.constant 2 : index
    %c0_40 = arith.constant 0 : index
    %45 = vector.load %arg6[%c2, %c0_40] : memref<18x72xf32, #tpu.memory_space<vmem>>, vector<16x72xf32>
    %c1_41 = arith.constant 1 : index
    %c1_42 = arith.constant 1 : index
    %c0_43 = arith.constant 0 : index
    %c0_44 = arith.constant 0 : index
    %46 = vector.load %arg2[%c1_41, %c1_42, %c0_43, %c0_44] : memref<2x2x72x128xf32, #tpu.memory_space<vmem>>, vector<1x1x72x128xf32>
    %47 = vector.shape_cast %46 : vector<1x1x72x128xf32> to vector<72x128xf32>
    %cst_45 = arith.constant dense<0.000000e+00> : vector<16x128xf32>
    %48 = tpu.matmul %45, %47, %cst_45 {dimension_numbers = #tpu.dot_dimension_numbers<[1], [0], [0], [1], [0, 0, 1, 1], [], []>} : vector<16x72xf32>, vector<72x128xf32>, vector<16x128xf32> -> vector<16x128xf32>
    %49 = arith.addf %44, %48 : vector<16x128xf32>
    %50 = arith.mulf %49, %23 : vector<16x128xf32>
    %51 = arith.addf %50, %26 : vector<16x128xf32>
    %c0_46 = arith.constant 0 : index
    %c1_47 = arith.constant 1 : index
    %c0_48 = arith.constant 0 : index
    %c0_49 = arith.constant 0 : index
    %52 = vector.load %arg5[%c0_46, %c1_47, %c0_48, %c0_49] : memref<1x2x16x128xf32, #tpu.memory_space<vmem>>, vector<1x1x16x128xf32>
    %53 = vector.shape_cast %52 : vector<1x1x16x128xf32> to vector<16x128xf32>
    %54 = vector.shape_cast %51 : vector<16x128xf32> to vector<1x1x16x128xf32>
    tpu.vector_store %arg5[%c0_46, %c1_47, %c0_48, %c0_49], %54 {strides = array<i32>} : memref<1x2x16x128xf32, #tpu.memory_space<vmem>>, vector<1x1x16x128xf32>,
    return
  }
  func.func @transform_0(%arg0: i32) -> (i32, i32, i32, i32) {
    %c0_i32 = arith.constant 0 : i32
    %c0_i32_0 = arith.constant 0 : i32
    %c0_i32_1 = arith.constant 0 : i32
    %c0_i32_2 = arith.constant 0 : i32
    return %arg0, %c0_i32, %c0_i32_0, %c0_i32_1 : i32, i32, i32, i32
  }
  func.func @transform_1(%arg0: i32) -> (i32, i32, i32, i32) {
    %c0_i32 = arith.constant 0 : i32
    %c0_i32_0 = arith.constant 0 : i32
    %c0_i32_1 = arith.constant 0 : i32
    %c0_i32_2 = arith.constant 0 : i32
    %c0_i32_3 = arith.constant 0 : i32
    return %c0_i32, %c0_i32_0, %c0_i32_1, %c0_i32_2 : i32, i32, i32, i32
  }
  func.func @transform_2(%arg0: i32) -> (i32, i32) {
    %c0_i32 = arith.constant 0 : i32
    %c0_i32_0 = arith.constant 0 : i32
    %c0_i32_1 = arith.constant 0 : i32
    return %c0_i32, %c0_i32_0 : i32, i32
  }
  func.func @transform_3(%arg0: i32) -> (i32, i32) {
    %c0_i32 = arith.constant 0 : i32
    %c0_i32_0 = arith.constant 0 : i32
    %c0_i32_1 = arith.constant 0 : i32
    return %c0_i32, %c0_i32_0 : i32, i32
  }
  func.func @transform_4(%arg0: i32) -> (i32, i32, i32, i32) {
    %c0_i32 = arith.constant 0 : i32
    %c0_i32_0 = arith.constant 0 : i32
    %c0_i32_1 = arith.constant 0 : i32
    %c0_i32_2 = arith.constant 0 : i32
    return %arg0, %c0_i32, %c0_i32_0, %c0_i32_1 : i32, i32, i32, i32
  }
}

</mosaic_0001>

<llo_original>
// kernel: tpu_custom_call.1
$region0: #{tpu_custom_call.1}
  #allocation0 [shape = 'u32[]', space=smem, size = 0x4, offset = 0x4, fixed_abs, tag = 'smem constant byte address 0x4 - core index']
  #allocation1 [shape = 'u32[144,128]{1,0:T(1,128)}', space=vmem, size = 0x12000, scoped, tag = 'internal scratch']
  #allocation2 [shape = 'f32[18,72]{1,0:T(8,128)}', space=vmem, size = 0x3000, scoped, tag = 'scratch operand']
  %s0 = inlined_call_operand.hbm [shape: f32[2,4,16,16], index: 0, kind: input, shape index: {}]
  %s1 = inlined_call_operand.hbm [shape: f32[2,2,72,128], index: 1, kind: input, shape index: {}]
  %s2 = inlined_call_operand.vmem [shape: f32[1,128], index: 2, kind: input, shape index: {}]
  %s3 = inlined_call_operand.vmem [shape: f32[1,128], index: 3, kind: input, shape index: {}]
  %s4 = inlined_call_operand.hbm [shape: f32[2,2,16,128], index: 4, kind: output, shape index: {}]
  %s5 = sld [smem:[#allocation0]]
  $region57: #{tpu_custom_call.1} parent=0
    _
  %s7 = ssub.s32 1, %s5
  %s8 = scalar_select 0, %s7, %s5
  $region1: #{tpu_custom_call.1} parent=0
    #allocation3 [shape = 'u8[65536]{0}', space=vmem, size = 0x10000, scoped, tag = 'input window, operand 0']
    #allocation4 [shape = 's32[2]{0}', space=sflag, size = 0x8, scoped, tag = 'scoped memory for tpu_custom_call.1']
    #allocation5 [shape = 's32[2]{0}', space=sflag, size = 0x8, scoped, tag = 'scoped memory for tpu_custom_call.1']
    #allocation6 [shape = 'u8[147456]{0}', space=vmem, size = 0x24000, scoped, tag = 'input window, operand 1, single buffered']
    #allocation7 [shape = 's32[1]{0}', space=sflag, size = 0x4, scoped, tag = 'scoped memory for tpu_custom_call.1']
    #allocation8 [shape = 'u8[32768]{0}', space=vmem, size = 0x8000, scoped, tag = 'output window, operand 0']
    %9 = vsyncpa [#allocation4], 0
    %s10 = scalar_lea.sflag [#allocation4], 1
    %11 = vsyncpa %s10, 0
    %12 = vsyncpa [#allocation7], 0
    %13 = vsyncpa [#allocation5], 0
    %s14 = scalar_lea.sflag [#allocation5], 1
    %15 = vsyncpa %s14, 0
    loop: start=0, step=1, limit=4
    $region2: #{tpu_custom_call.1} parent=1 // loop_pre_header
      _
    $region3: #{tpu_custom_call.1} parent=1 // loop_header
      %s17 = sphi 0, %s21
      %p18 = scmp.ge.s32.totalorder %s17, 4
      %s27 = sphi 0, %s29
      %s30 = sphi 0, %s27
      %s31 = sphi 0, %s30
      %s47 = sphi 0, %s31
      %s51 = sphi 0, %s51
      %s53 = sphi 0, %s51
      %s54 = sphi 0, %s53
      %s68 = sphi 0, %s54
      %s72 = sphi 0, %s72
      %s74 = sphi 0, %s72
      %s75 = sphi 0, %s74
      %s89 = sphi 0, %s75
      %s93 = sphi 0, %s93
      %s95 = sphi 0, %s93
      %s96 = sphi 0, %s95
      %s110 = sphi 0, %s96
      %s116 = sphi 0, %s118
      %s119 = sphi 0, %s116
      %s120 = sphi 0, %s119
      %s136 = sphi 0, %s120
    $region4: #{tpu_custom_call.1} parent=1 // loop_header_branch
      %20 = sbr.rel (%p18) target = $region8
    $region5: #{tpu_custom_call.1} parent=1 // loop_body
      %s22 = ssub.s32 %s17, 1
      %s23 = ssub.s32 %s17, 2
      %s24 = sadd.s32 %s17, 1
      %s25 = ssub.s32 %s17, %s24
      %p26 = scmp.eq.s32.totalorder %s25, 0
      %s28 = sadd.s32 %s27, 1
      %s29 = scalar_select %p26, %s27, %s28
      %p32 = pneg %p26
      %p33 = scmp.eq.s32.totalorder %s17, 1
      %p34 = por %p32, %p33
      %p35 = scmp.ne.s32.totalorder %s27, %s30
      %p36 = scmp.eq.s32.totalorder %s17, 0
      %p37 = por %p35, %p36
      %p38 = scmp.ne.s32.totalorder %s27, %s30
      %p39 = scmp.eq.s32.totalorder %s22, 1
      %p40 = por %p38, %p39
      %p41 = scmp.ne.s32.totalorder %s30, %s31
      %p42 = scmp.eq.s32.totalorder %s22, 0
      %p43 = por %p41, %p42
      %p44 = scmp.ne.s32.totalorder %s30, %s31
      %p45 = scmp.eq.s32.totalorder %s23, 1
      %p46 = por %p44, %p45
      %p48 = scmp.ne.s32.totalorder %s31, %s47
      %p49 = scmp.eq.s32.totalorder %s23, 0
      %p50 = por %p48, %p49
      %s52 = sadd.s32 %s51, 1
      %p55 = scmp.eq.s32.totalorder %s17, 1
      %p56 = scmp.ne.s32.totalorder %s51, %s53
      %p57 = scmp.eq.s32.totalorder %s17, 0
      %p58 = por %p56, %p57
      %p59 = scmp.ne.s32.totalorder %s51, %s53
      %p60 = scmp.eq.s32.totalorder %s22, 1
      %p61 = por %p59, %p60
      %p62 = scmp.ne.s32.totalorder %s53, %s54
      %p63 = scmp.eq.s32.totalorder %s22, 0
      %p64 = por %p62, %p63
      %p65 = scmp.ne.s32.totalorder %s53, %s54
      %p66 = scmp.eq.s32.totalorder %s23, 1
      %p67 = por %p65, %p66
      %p69 = scmp.ne.s32.totalorder %s54, %s68
      %p70 = scmp.eq.s32.totalorder %s23, 0
      %p71 = por %p69, %p70
      %s73 = sadd.s32 %s72, 1
      %p76 = scmp.eq.s32.totalorder %s17, 1
      %p77 = scmp.ne.s32.totalorder %s72, %s74
      %p78 = scmp.eq.s32.totalorder %s17, 0
      %p79 = por %p77, %p78
      %p80 = scmp.ne.s32.totalorder %s72, %s74
      %p81 = scmp.eq.s32.totalorder %s22, 1
      %p82 = por %p80, %p81
      %p83 = scmp.ne.s32.totalorder %s74, %s75
      %p84 = scmp.eq.s32.totalorder %s22, 0
      %p85 = por %p83, %p84
      %p86 = scmp.ne.s32.totalorder %s74, %s75
      %p87 = scmp.eq.s32.totalorder %s23, 1
      %p88 = por %p86, %p87
      %p90 = scmp.ne.s32.totalorder %s75, %s89
      %p91 = scmp.eq.s32.totalorder %s23, 0
      %p92 = por %p90, %p91
      %s94 = sadd.s32 %s93, 1
      %p97 = scmp.eq.s32.totalorder %s17, 1
      %p98 = scmp.ne.s32.totalorder %s93, %s95
      %p99 = scmp.eq.s32.totalorder %s17, 0
      %p100 = por %p98, %p99
      %p101 = scmp.ne.s32.totalorder %s93, %s95
      %p102 = scmp.eq.s32.totalorder %s22, 1
      %p103 = por %p101, %p102
      %p104 = scmp.ne.s32.totalorder %s95, %s96
      %p105 = scmp.eq.s32.totalorder %s22, 0
      %p106 = por %p104, %p105
      %p107 = scmp.ne.s32.totalorder %s95, %s96
      %p108 = scmp.eq.s32.totalorder %s23, 1
      %p109 = por %p107, %p108
      %p111 = scmp.ne.s32.totalorder %s96, %s110
      %p112 = scmp.eq.s32.totalorder %s23, 0
      %p113 = por %p111, %p112
      %s114 = ssub.s32 %s17, %s24
      %p115 = scmp.eq.s32.totalorder %s114, 0
      %s117 = sadd.s32 %s116, 1
      %s118 = scalar_select %p115, %s116, %s117
      %p121 = pneg %p115
      %p122 = scmp.eq.s32.totalorder %s17, 1
      %p123 = por %p121, %p122
      %p124 = scmp.ne.s32.totalorder %s116, %s119
      %p125 = scmp.eq.s32.totalorder %s17, 0
      %p126 = por %p124, %p125
      %p127 = scmp.ne.s32.totalorder %s116, %s119
      %p128 = scmp.eq.s32.totalorder %s22, 1
      %p129 = por %p127, %p128
      %p130 = scmp.ne.s32.totalorder %s119, %s120
      %p131 = scmp.eq.s32.totalorder %s22, 0
      %p132 = por %p130, %p131
      %p133 = scmp.ne.s32.totalorder %s119, %s120
      %p134 = scmp.eq.s32.totalorder %s23, 1
      %p135 = por %p133, %p134
      %p137 = scmp.ne.s32.totalorder %s120, %s136
      %p138 = scmp.eq.s32.totalorder %s23, 0
      %p139 = por %p137, %p138
      %p140 = scmp.le.s32.totalorder 1, %s17
      %p141 = scmp.lt.s32.totalorder %s17, 3
      %p142 = pnand %p140, %p141
      %p143 = pneg %p142
      // Predicated region
      $region9: #{tpu_custom_call.1} parent=5 // pred_check
        _
      $region10: #{tpu_custom_call.1} parent=5 // pred_check_branch
        %145 = sbr.rel (%p142) target = $region12
      $region11: #{tpu_custom_call.1} parent=5 // pred_region
        %s146 = ssub.s32 %s17, 1
        // Predicated region
        $region13: #{tpu_custom_call.1} parent=11 // pred_check
          %p147 = pneg %p64
        $region14: #{tpu_custom_call.1} parent=11 // pred_check_branch
          %149 = sbr.rel (%p147) target = $region16
        $region15: #{tpu_custom_call.1} parent=11 // pred_region
          %s151 = ssub.s32 4608, 4608
          %152 = vsyncadd [#allocation7], %s151
          %s153 = sshll.u32 [#allocation6], 4
          %s154 = int_to_ptr.vmem [resolvable:$true] %s153
          %159 = dma.hbm_to_vmem [thread:$0]  %s1, 4608, %s154, [#allocation7], 128, 128, 8
        $region16: #{tpu_custom_call.1} parent=11 // pred_fallthru
          _
        // Predicated region
        $region17: #{tpu_custom_call.1} parent=11 // pred_check
          %p160 = pneg %p85
        $region18: #{tpu_custom_call.1} parent=11 // pred_check_branch
          %162 = sbr.rel (%p160) target = $region20
        $region19: #{tpu_custom_call.1} parent=11 // pred_region
          _
        $region20: #{tpu_custom_call.1} parent=11 // pred_fallthru
          _
        // Predicated region
        $region21: #{tpu_custom_call.1} parent=11 // pred_check
          %p163 = pneg %p106
        $region22: #{tpu_custom_call.1} parent=11 // pred_check_branch
          %165 = sbr.rel (%p163) target = $region24
        $region23: #{tpu_custom_call.1} parent=11 // pred_region
          _
        $region24: #{tpu_custom_call.1} parent=11 // pred_fallthru
          _
      $region12: #{tpu_custom_call.1} parent=5 // pred_fallthru
        _
      %p166 = scmp.lt.s32.totalorder %s17, 2
      // Predicated region
      $region25: #{tpu_custom_call.1} parent=5 // pred_check
        %p167 = pneg %p166
      $region26: #{tpu_custom_call.1} parent=5 // pred_check_branch
        %169 = sbr.rel (%p167) target = $region28
      $region27: #{tpu_custom_call.1} parent=5 // pred_region
        // Predicated region
        $region29: #{tpu_custom_call.1} parent=27 // pred_check
          %p170 = pneg %p37
        $region30: #{tpu_custom_call.1} parent=27 // pred_check_branch
          %172 = sbr.rel (%p170) target = $region32
        $region31: #{tpu_custom_call.1} parent=27 // pred_region
          %s173 = sand.u32 %s27, 1
          %s174 = scalar_lea.sflag [#allocation4], %s173
          %s175 = sand.u32 %s27, 1
          %s176 = smul.addr %s175, 64
          %s177 = scalar_lea.vmem [#allocation3], %s176
          %s179 = ssub.s32 1024, 1024
          %180 = vsyncadd %s174, %s179
          %s181 = smul.addr %s17, 8
          %s182 = smul.addr %s181, 128
          %s183 = scalar_lea.hbm %s0, %s182
          %s184 = sshll.u32 %s177, 4
          %s185 = int_to_ptr.vmem [resolvable:$true] %s184
          %190 = dma.hbm_to_vmem [thread:$0]  %s183, 1024, %s185, %s174, 128, 128, 8
        $region32: #{tpu_custom_call.1} parent=27 // pred_fallthru
          _
      $region28: #{tpu_custom_call.1} parent=5 // pred_fallthru
        _
      %p191 = scmp.le.s32.totalorder 1, %s17
      %p192 = scmp.lt.s32.totalorder %s17, 3
      %p193 = pnand %p191, %p192
      %p194 = pneg %p193
      // Predicated region
      $region33: #{tpu_custom_call.1} parent=5 // pred_check
        _
      $region34: #{tpu_custom_call.1} parent=5 // pred_check_branch
        %196 = sbr.rel (%p193) target = $region36
      $region35: #{tpu_custom_call.1} parent=5 // pred_region
        %s197 = ssub.s32 %s17, 1
        %s198 = sand.u32 %s30, 1
        %s199 = scalar_lea.sflag [#allocation4], %s198
        %s200 = sand.u32 %s30, 1
        %s201 = smul.addr %s200, 64
        %s202 = scalar_lea.vmem [#allocation3], %s201
        // Predicated region
        $region37: #{tpu_custom_call.1} parent=35 // pred_check
          %p203 = pneg %p43
        $region38: #{tpu_custom_call.1} parent=35 // pred_check_branch
          %205 = sbr.rel (%p203) target = $region40
        $region39: #{tpu_custom_call.1} parent=35 // pred_region
          %206 = dma.done %s199, 1024
        $region40: #{tpu_custom_call.1} parent=35 // pred_fallthru
          _
        // Predicated region
        $region41: #{tpu_custom_call.1} parent=35 // pred_check
          %p207 = pneg %p64
        $region42: #{tpu_custom_call.1} parent=35 // pred_check_branch
          %209 = sbr.rel (%p207) target = $region44
        $region43: #{tpu_custom_call.1} parent=35 // pred_region
          %210 = dma.done [#allocation7], 4608
        $region44: #{tpu_custom_call.1} parent=35 // pred_fallthru
          _
        %s211 = sand.u32 %s30, 1
        %s212 = scalar_lea.sflag [#allocation4], %s211
        %s213 = sand.u32 %s30, 1
        %s214 = smul.addr %s213, 64
        %s215 = scalar_lea.vmem [#allocation3], %s214
        %p216 = pneg %p43
        %p217 = pneg %p40
        %p218 = pneg %p64
        %p219 = pneg %p61
        %p220 = pneg %p85
        %p221 = pneg %p82
        %p222 = pneg %p106
        %p223 = pneg %p103
        %p224 = pneg %p132
        %p225 = pneg %p129
        %s226 = sand.u32 %s119, 1
        %s227 = scalar_lea.sflag [#allocation5], %s226
        %s228 = sand.u32 %s119, 1
        %s229 = smul.addr %s228, 32
        %s230 = scalar_lea.vmem [#allocation8], %s229
        %v231 = vld [vmem:[%s202] sm:$0xff]
        %v232 = vld [vmem:[%s202 + $0x8] sm:$0xff]
        %v233 = vld [vmem:[%s202 + $0x10] sm:$0xff]
        %v234 = vld [vmem:[%s202 + $0x18] sm:$0xff]
        %v235 = vld [vmem:[%s202 + $0x20] sm:$0xff]
        %v236 = vld [vmem:[%s202 + $0x28] sm:$0xff]
        %v237 = vld [vmem:[%s202 + $0x30] sm:$0xff]
        %v238 = vld [vmem:[%s202 + $0x38] sm:$0xff]
        %vm239 = vcmp.gt.f32.partialorder %v231, 0.0
        %vm240 = vcmp.gt.f32.partialorder %v232, 0.0
        %vm241 = vcmp.gt.f32.partialorder %v233, 0.0
        %vm242 = vcmp.gt.f32.partialorder %v234, 0.0
        %vm243 = vcmp.gt.f32.partialorder %v235, 0.0
        %vm244 = vcmp.gt.f32.partialorder %v236, 0.0
        %vm245 = vcmp.gt.f32.partialorder %v237, 0.0
        %vm246 = vcmp.gt.f32.partialorder %v238, 0.0
        %v247 = vmul.f32 %v231, 0.2
        %v248 = vmul.f32 %v232, 0.2
        %v249 = vmul.f32 %v233, 0.2
        %v250 = vmul.f32 %v234, 0.2
        %v251 = vmul.f32 %v235, 0.2
        %v252 = vmul.f32 %v236, 0.2
        %v253 = vmul.f32 %v237, 0.2
        %v254 = vmul.f32 %v238, 0.2
        %v255 = vsel %vm239, %v231, %v247
        %v256 = vsel %vm240, %v232, %v248
        %v257 = vsel %vm241, %v233, %v249
        %v258 = vsel %vm242, %v234, %v250
        %v259 = vsel %vm243, %v235, %v251
        %v260 = vsel %vm244, %v236, %v252
        %v261 = vsel %vm245, %v237, %v253
        %v262 = vsel %vm246, %v238, %v254
        %vm263 = vcmask 588800
        %264 = vst.msk [vmem:[#allocation2] sm:$0xff] %vm263, 0.0
        %265 = vst.msk [vmem:[#allocation2 + $0x8] sm:$0xff] %vm263, 0.0
        %vm266 = vcmask 582656
        %267 = vst.msk [vmem:[#allocation2 + $0x10] sm:$0x3] %vm266, 0.0
        %270 = vrot.lane.b32.xlu0 %v255, 1
        %v271 = vpop.permute.xlu0 %270
        %272 = vrot.lane.b32.xlu0 %v256, 1
        %v273 = vpop.permute.xlu0 %272
        %vm276 = vcmask 138248
        %277 = vst.msk [vmem:[#allocation2 + $0x1] sm:$0xff] %vm276, %v271
        %278 = vst.msk [vmem:[#allocation2 + $0x9] sm:$0xff] %vm276, %v273
        %281 = vrot.lane.b32.xlu0 %v257, 19
        %v282 = vpop.permute.xlu0 %281
        %283 = vrot.lane.b32.xlu0 %v258, 19
        %v284 = vpop.permute.xlu0 %283
        %vm287 = vcmask 285848
        %288 = vst.msk [vmem:[#allocation2 + $0x1] sm:$0xff] %vm287, %v282
        %289 = vst.msk [vmem:[#allocation2 + $0x9] sm:$0xff] %vm287, %v284
        %292 = vrot.lane.b32.xlu0 %v259, 37
        %v293 = vpop.permute.xlu0 %292
        %294 = vrot.lane.b32.xlu0 %v260, 37
        %v295 = vpop.permute.xlu0 %294
        %vm298 = vcmask 433448
        %299 = vst.msk [vmem:[#allocation2 + $0x1] sm:$0xff] %vm298, %v293
        %300 = vst.msk [vmem:[#allocation2 + $0x9] sm:$0xff] %vm298, %v295
        %303 = vrot.lane.b32.xlu0 %v261, 55
        %v304 = vpop.permute.xlu0 %303
        %305 = vrot.lane.b32.xlu0 %v262, 55
        %v306 = vpop.permute.xlu0 %305
        %vm309 = vcmask 581048
        %310 = vst.msk [vmem:[#allocation2 + $0x1] sm:$0xff] %vm309, %v304
        %311 = vst.msk [vmem:[#allocation2 + $0x9] sm:$0xff] %vm309, %v306
        %v312 = vld [vmem:[%s2] sm:$0x1]
        %v314 = vlaneseq
        %v315 = vshrl.u32 %v314, 7
        %v316 = vsub.s32 0, %v315
        %v317 = vrot.slane %v312, %v316
        %v319 = vld [vmem:[%s3] sm:$0x1]
        %v321 = vlaneseq
        %v322 = vshrl.u32 %v321, 7
        %v323 = vsub.s32 0, %v322
        %v324 = vrot.slane %v319, %v323
        %v326 = vld [vmem:[#allocation2] sm:$0xff]
        %v327 = vld [vmem:[#allocation2 + $0x8] sm:$0xff]
        %v328 = vld [vmem:[#allocation6] sm:$0xff]
        %v329 = vld [vmem:[#allocation6 + $0x8] sm:$0xff]
        %v330 = vld [vmem:[#allocation6 + $0x10] sm:$0xff]
        %v331 = vld [vmem:[#allocation6 + $0x18] sm:$0xff]
        %v332 = vld [vmem:[#allocation6 + $0x20] sm:$0xff]
        %v333 = vld [vmem:[#allocation6 + $0x28] sm:$0xff]
        %v334 = vld [vmem:[#allocation6 + $0x30] sm:$0xff]
        %v335 = vld [vmem:[#allocation6 + $0x38] sm:$0xff]
        %v336 = vld [vmem:[#allocation6 + $0x40] sm:$0xff]
        %v337 = vld [vmem:[#allocation2 + $0x1] sm:$0xff]
        %v338 = vld [vmem:[#allocation2 + $0x9] sm:$0xff]
        %s339 = scalar_lea.vmem [#allocation6], 72
        %v340 = vld [vmem:[%s339] sm:$0xff]
        %v341 = vld [vmem:[%s339 + $0x8] sm:$0xff]
        %v342 = vld [vmem:[%s339 + $0x10] sm:$0xff]
        %v343 = vld [vmem:[%s339 + $0x18] sm:$0xff]
        %v344 = vld [vmem:[%s339 + $0x20] sm:$0xff]
        %v345 = vld [vmem:[%s339 + $0x28] sm:$0xff]
        %v346 = vld [vmem:[%s339 + $0x30] sm:$0xff]
        %v347 = vld [vmem:[%s339 + $0x38] sm:$0xff]
        %v348 = vld [vmem:[%s339 + $0x40] sm:$0xff]
        %v350 = vsel %vm263, %v337, 0
        %v353 = vsel %vm263, %v338, 0
        %355 = vmatprep.subr.mxu0 0.0
        %356 = vmatpush1.msra.mxu0 %v340
        %357 = vmatprep.subr.mxu0 0.0
        %358 = vmatpush1.msra.mxu0 %v341
        %359 = vmatprep.subr.mxu0 0.0
        %360 = vmatpush1.msra.mxu0 %v342
        %361 = vmatprep.subr.mxu0 0.0
        %362 = vmatpush1.msra.mxu0 %v343
        %363 = vmatprep.subr.mxu0 0.0
        %364 = vmatpush1.msra.mxu0 %v344
        %365 = vmatprep.subr.mxu0 0.0
        %366 = vmatpush1.msra.mxu0 %v345
        %367 = vmatprep.subr.mxu0 0.0
        %368 = vmatpush1.msra.mxu0 %v346
        %369 = vmatprep.subr.mxu0 0.0
        %370 = vmatpush1.msra.mxu0 %v347
        %371 = vmatprep.subr.mxu0 0.0
        %372 = vmatpush1.msra.mxu0 %v348
        %373 = vmatprep.subr.mxu0 0.0
        %374 = vmatpush1.msra.mxu0 0.0
        %375 = vmatprep.subr.mxu0 0.0
        %376 = vmatpush1.msra.mxu0 0.0
        %377 = vmatprep.subr.mxu0 0.0
        %378 = vmatpush1.msra.mxu0 0.0
        %379 = vmatprep.subr.mxu0 0.0
        %380 = vmatpush1.msra.mxu0 0.0
        %381 = vmatprep.subr.mxu0 0.0
        %382 = vmatpush1.msra.mxu0 0.0
        %383 = vmatprep.subr.mxu0 0.0
        %384 = vmatpush1.msra.mxu0 0.0
        %385 = vmatprep.subr.mxu0 0.0
        %386 = vmatpush1.msra.mxu0 0.0
        %387 = vmatprep.subr.mxu0 0.0
        %388 = vmatpush1.msra.mxu0 0.0
        %389 = vmatprep.subr.mxu0 0.0
        %390 = vmatpush1.msra.mxu0 0.0
        %391 = vmatprep.subr.mxu0 0.0
        %392 = vmatpush1.msra.mxu0 0.0
        %393 = vmatprep.subr.mxu0 0.0
        %394 = vmatpush1.msra.mxu0 0.0
        %395 = vmatprep.subr.mxu0 0.0
        %396 = vmatpush1.msra.mxu0 0.0
        %397 = vmatprep.subr.mxu0 0.0
        %398 = vmatpush1.msra.mxu0 0.0
        %399 = vmatprep.subr.mxu0 0.0
        %400 = vmatpush1.msra.mxu0 0.0
        %401 = vmatprep.subr.mxu0 0.0
        %402 = vmatpush1.msra.mxu0 0.0
        %403 = vmatprep.subr.mxu0 0.0
        %404 = vmatpush1.msra.mxu0 0.0
        %405 = vmatprep.subr.mxu0 0.0
        %406 = vmatpush1.msra.mxu0 0.0
        %407 = vmatprep.subr.mxu0 0.0
        %408 = vmatpush1.msra.mxu0 0.0
        %409 = vmatprep.subr.mxu0 0.0
        %410 = vmatpush1.msra.mxu0 0.0
        %411 = vmatprep.subr.mxu0 0.0
        %412 = vmatpush1.msra.mxu0 0.0
        %413 = vmatprep.subr.mxu0 0.0
        %414 = vmatpush1.msra.mxu0 0.0
        %415 = vmatprep.subr.mxu0 0.0
        %416 = vmatpush1.msra.mxu0 0.0
        %417 = vmatprep.subr.mxu0 0.0
        %418 = vmatpush1.msra.mxu0 0.0
        %419 = vmatprep.mubr.f32.mxu0 0.0
        %420 = vmatmul.mubr.f32.gmra.mrb[0].mxu0 %v350
        %v421 = vpop.f32.mrb[0].mxu0
        %v422 = vadd.f32 0.0, %v421
        %v423 = vpop.f32.mrb[0].mxu0
        %424 = vmatprep.mubr.f32.mxu0 0.0
        %425 = vmatmul.mubr.f32.gmra.mrb[0].mxu0 %v353
        %v426 = vpop.f32.mrb[0].mxu0
        %v427 = vadd.f32 0.0, %v426
        %v428 = vpop.f32.mrb[0].mxu0
        %429 = vdwg.mxu0
        %v431 = vsel %vm263, %v326, 0
        %v434 = vsel %vm263, %v327, 0
        %436 = vmatprep.subr.mxu0 0.0
        %437 = vmatpush1.msra.mxu0 %v328
        %438 = vmatprep.subr.mxu0 0.0
        %439 = vmatpush1.msra.mxu0 %v329
        %440 = vmatprep.subr.mxu0 0.0
        %441 = vmatpush1.msra.mxu0 %v330
        %442 = vmatprep.subr.mxu0 0.0
        %443 = vmatpush1.msra.mxu0 %v331
        %444 = vmatprep.subr.mxu0 0.0
        %445 = vmatpush1.msra.mxu0 %v332
        %446 = vmatprep.subr.mxu0 0.0
        %447 = vmatpush1.msra.mxu0 %v333
        %448 = vmatprep.subr.mxu0 0.0
        %449 = vmatpush1.msra.mxu0 %v334
        %450 = vmatprep.subr.mxu0 0.0
        %451 = vmatpush1.msra.mxu0 %v335
        %452 = vmatprep.subr.mxu0 0.0
        %453 = vmatpush1.msra.mxu0 %v336
        %454 = vmatprep.subr.mxu0 0.0
        %455 = vmatpush1.msra.mxu0 0.0
        %456 = vmatprep.subr.mxu0 0.0
        %457 = vmatpush1.msra.mxu0 0.0
        %458 = vmatprep.subr.mxu0 0.0
        %459 = vmatpush1.msra.mxu0 0.0
        %460 = vmatprep.subr.mxu0 0.0
        %461 = vmatpush1.msra.mxu0 0.0
        %462 = vmatprep.subr.mxu0 0.0
        %463 = vmatpush1.msra.mxu0 0.0
        %464 = vmatprep.subr.mxu0 0.0
        %465 = vmatpush1.msra.mxu0 0.0
        %466 = vmatprep.subr.mxu0 0.0
        %467 = vmatpush1.msra.mxu0 0.0
        %468 = vmatprep.subr.mxu0 0.0
        %469 = vmatpush1.msra.mxu0 0.0
        %470 = vmatprep.subr.mxu0 0.0
        %471 = vmatpush1.msra.mxu0 0.0
        %472 = vmatprep.subr.mxu0 0.0
        %473 = vmatpush1.msra.mxu0 0.0
        %474 = vmatprep.subr.mxu0 0.0
        %475 = vmatpush1.msra.mxu0 0.0
        %476 = vmatprep.subr.mxu0 0.0
        %477 = vmatpush1.msra.mxu0 0.0
        %478 = vmatprep.subr.mxu0 0.0
        %479 = vmatpush1.msra.mxu0 0.0
        %480 = vmatprep.subr.mxu0 0.0
        %481 = vmatpush1.msra.mxu0 0.0
        %482 = vmatprep.subr.mxu0 0.0
        %483 = vmatpush1.msra.mxu0 0.0
        %484 = vmatprep.subr.mxu0 0.0
        %485 = vmatpush1.msra.mxu0 0.0
        %486 = vmatprep.subr.mxu0 0.0
        %487 = vmatpush1.msra.mxu0 0.0
        %488 = vmatprep.subr.mxu0 0.0
        %489 = vmatpush1.msra.mxu0 0.0
        %490 = vmatprep.subr.mxu0 0.0
        %491 = vmatpush1.msra.mxu0 0.0
        %492 = vmatprep.subr.mxu0 0.0
        %493 = vmatpush1.msra.mxu0 0.0
        %494 = vmatprep.subr.mxu0 0.0
        %495 = vmatpush1.msra.mxu0 0.0
        %496 = vmatprep.subr.mxu0 0.0
        %497 = vmatpush1.msra.mxu0 0.0
        %498 = vmatprep.subr.mxu0 0.0
        %499 = vmatpush1.msra.mxu0 0.0
        %500 = vmatprep.mubr.f32.mxu0 0.0
        %501 = vmatmul.mubr.f32.gmra.mrb[0].mxu0 %v431
        %v502 = vpop.f32.mrb[0].mxu0
        %v503 = vadd.f32 %v422, %v502
        %v504 = vpop.f32.mrb[0].mxu0
        %505 = vmatprep.mubr.f32.mxu0 0.0
        %506 = vmatmul.mubr.f32.gmra.mrb[0].mxu0 %v434
        %v507 = vpop.f32.mrb[0].mxu0
        %v508 = vadd.f32 %v427, %v507
        %v509 = vpop.f32.mrb[0].mxu0
        %510 = vdwg.mxu0
        %v511 = vmul.f32 %v503, %v317
        %v512 = vmul.f32 %v508, %v317
        %v513 = vadd.f32 %v511, %v324
        %v514 = vadd.f32 %v512, %v324
        %515 = vst [vmem:[%s230] sm:$0xff] %v513
        %516 = vst [vmem:[%s230 + $0x8] sm:$0xff] %v514
        %v517 = vld [vmem:[#allocation2 + $0x1] sm:$0xff]
        %v518 = vld [vmem:[#allocation2 + $0x9] sm:$0xff]
        %s519 = scalar_lea.vmem [#allocation6], 144
        %v520 = vld [vmem:[%s519] sm:$0xff]
        %v521 = vld [vmem:[%s519 + $0x8] sm:$0xff]
        %v522 = vld [vmem:[%s519 + $0x10] sm:$0xff]
        %v523 = vld [vmem:[%s519 + $0x18] sm:$0xff]
        %v524 = vld [vmem:[%s519 + $0x20] sm:$0xff]
        %v525 = vld [vmem:[%s519 + $0x28] sm:$0xff]
        %v526 = vld [vmem:[%s519 + $0x30] sm:$0xff]
        %v527 = vld [vmem:[%s519 + $0x38] sm:$0xff]
        %v528 = vld [vmem:[%s519 + $0x40] sm:$0xff]
        %v529 = vld [vmem:[#allocation2 + $0x2] sm:$0xff]
        %v530 = vld [vmem:[#allocation2 + $0xa] sm:$0xff]
        %s531 = scalar_lea.vmem [#allocation6], 216
        %v532 = vld [vmem:[%s531] sm:$0xff]
        %v533 = vld [vmem:[%s531 + $0x8] sm:$0xff]
        %v534 = vld [vmem:[%s531 + $0x10] sm:$0xff]
        %v535 = vld [vmem:[%s531 + $0x18] sm:$0xff]
        %v536 = vld [vmem:[%s531 + $0x20] sm:$0xff]
        %v537 = vld [vmem:[%s531 + $0x28] sm:$0xff]
        %v538 = vld [vmem:[%s531 + $0x30] sm:$0xff]
        %v539 = vld [vmem:[%s531 + $0x38] sm:$0xff]
        %v540 = vld [vmem:[%s531 + $0x40] sm:$0xff]
        %v542 = vsel %vm263, %v529, 0
        %v545 = vsel %vm263, %v530, 0
        %547 = vmatprep.subr.mxu0 0.0
        %548 = vmatpush1.msra.mxu0 %v532
        %549 = vmatprep.subr.mxu0 0.0
        %550 = vmatpush1.msra.mxu0 %v533
        %551 = vmatprep.subr.mxu0 0.0
        %552 = vmatpush1.msra.mxu0 %v534
        %553 = vmatprep.subr.mxu0 0.0
        %554 = vmatpush1.msra.mxu0 %v535
        %555 = vmatprep.subr.mxu0 0.0
        %556 = vmatpush1.msra.mxu0 %v536
        %557 = vmatprep.subr.mxu0 0.0
        %558 = vmatpush1.msra.mxu0 %v537
        %559 = vmatprep.subr.mxu0 0.0
        %560 = vmatpush1.msra.mxu0 %v538
        %561 = vmatprep.subr.mxu0 0.0
        %562 = vmatpush1.msra.mxu0 %v539
        %563 = vmatprep.subr.mxu0 0.0
        %564 = vmatpush1.msra.mxu0 %v540
        %565 = vmatprep.subr.mxu0 0.0
        %566 = vmatpush1.msra.mxu0 0.0
        %567 = vmatprep.subr.mxu0 0.0
        %568 = vmatpush1.msra.mxu0 0.0
        %569 = vmatprep.subr.mxu0 0.0
        %570 = vmatpush1.msra.mxu0 0.0
        %571 = vmatprep.subr.mxu0 0.0
        %572 = vmatpush1.msra.mxu0 0.0
        %573 = vmatprep.subr.mxu0 0.0
        %574 = vmatpush1.msra.mxu0 0.0
        %575 = vmatprep.subr.mxu0 0.0
        %576 = vmatpush1.msra.mxu0 0.0
        %577 = vmatprep.subr.mxu0 0.0
        %578 = vmatpush1.msra.mxu0 0.0
        %579 = vmatprep.subr.mxu0 0.0
        %580 = vmatpush1.msra.mxu0 0.0
        %581 = vmatprep.subr.mxu0 0.0
        %582 = vmatpush1.msra.mxu0 0.0
        %583 = vmatprep.subr.mxu0 0.0
        %584 = vmatpush1.msra.mxu0 0.0
        %585 = vmatprep.subr.mxu0 0.0
        %586 = vmatpush1.msra.mxu0 0.0
        %587 = vmatprep.subr.mxu0 0.0
        %588 = vmatpush1.msra.mxu0 0.0
        %589 = vmatprep.subr.mxu0 0.0
        %590 = vmatpush1.msra.mxu0 0.0
        %591 = vmatprep.subr.mxu0 0.0
        %592 = vmatpush1.msra.mxu0 0.0
        %593 = vmatprep.subr.mxu0 0.0
        %594 = vmatpush1.msra.mxu0 0.0
        %595 = vmatprep.subr.mxu0 0.0
        %596 = vmatpush1.msra.mxu0 0.0
        %597 = vmatprep.subr.mxu0 0.0
        %598 = vmatpush1.msra.mxu0 0.0
        %599 = vmatprep.subr.mxu0 0.0
        %600 = vmatpush1.msra.mxu0 0.0
        %601 = vmatprep.subr.mxu0 0.0
        %602 = vmatpush1.msra.mxu0 0.0
        %603 = vmatprep.subr.mxu0 0.0
        %604 = vmatpush1.msra.mxu0 0.0
        %605 = vmatprep.subr.mxu0 0.0
        %606 = vmatpush1.msra.mxu0 0.0
        %607 = vmatprep.subr.mxu0 0.0
        %608 = vmatpush1.msra.mxu0 0.0
        %609 = vmatprep.subr.mxu0 0.0
        %610 = vmatpush1.msra.mxu0 0.0
        %611 = vmatprep.mubr.f32.mxu0 0.0
        %612 = vmatmul.mubr.f32.gmra.mrb[0].mxu0 %v542
        %v613 = vpop.f32.mrb[0].mxu0
        %v614 = vadd.f32 0.0, %v613
        %v615 = vpop.f32.mrb[0].mxu0
        %616 = vmatprep.mubr.f32.mxu0 0.0
        %617 = vmatmul.mubr.f32.gmra.mrb[0].mxu0 %v545
        %v618 = vpop.f32.mrb[0].mxu0
        %v619 = vadd.f32 0.0, %v618
        %v620 = vpop.f32.mrb[0].mxu0
        %621 = vdwg.mxu0
        %v623 = vsel %vm263, %v517, 0
        %v626 = vsel %vm263, %v518, 0
        %628 = vmatprep.subr.mxu0 0.0
        %629 = vmatpush1.msra.mxu0 %v520
        %630 = vmatprep.subr.mxu0 0.0
        %631 = vmatpush1.msra.mxu0 %v521
        %632 = vmatprep.subr.mxu0 0.0
        %633 = vmatpush1.msra.mxu0 %v522
        %634 = vmatprep.subr.mxu0 0.0
        %635 = vmatpush1.msra.mxu0 %v523
        %636 = vmatprep.subr.mxu0 0.0
        %637 = vmatpush1.msra.mxu0 %v524
        %638 = vmatprep.subr.mxu0 0.0
        %639 = vmatpush1.msra.mxu0 %v525
        %640 = vmatprep.subr.mxu0 0.0
        %641 = vmatpush1.msra.mxu0 %v526
        %642 = vmatprep.subr.mxu0 0.0
        %643 = vmatpush1.msra.mxu0 %v527
        %644 = vmatprep.subr.mxu0 0.0
        %645 = vmatpush1.msra.mxu0 %v528
        %646 = vmatprep.subr.mxu0 0.0
        %647 = vmatpush1.msra.mxu0 0.0
        %648 = vmatprep.subr.mxu0 0.0
        %649 = vmatpush1.msra.mxu0 0.0
        %650 = vmatprep.subr.mxu0 0.0
        %651 = vmatpush1.msra.mxu0 0.0
        %652 = vmatprep.subr.mxu0 0.0
        %653 = vmatpush1.msra.mxu0 0.0
        %654 = vmatprep.subr.mxu0 0.0
        %655 = vmatpush1.msra.mxu0 0.0
        %656 = vmatprep.subr.mxu0 0.0
        %657 = vmatpush1.msra.mxu0 0.0
        %658 = vmatprep.subr.mxu0 0.0
        %659 = vmatpush1.msra.mxu0 0.0
        %660 = vmatprep.subr.mxu0 0.0
        %661 = vmatpush1.msra.mxu0 0.0
        %662 = vmatprep.subr.mxu0 0.0
        %663 = vmatpush1.msra.mxu0 0.0
        %664 = vmatprep.subr.mxu0 0.0
        %665 = vmatpush1.msra.mxu0 0.0
        %666 = vmatprep.subr.mxu0 0.0
        %667 = vmatpush1.msra.mxu0 0.0
        %668 = vmatprep.subr.mxu0 0.0
        %669 = vmatpush1.msra.mxu0 0.0
        %670 = vmatprep.subr.mxu0 0.0
        %671 = vmatpush1.msra.mxu0 0.0
        %672 = vmatprep.subr.mxu0 0.0
        %673 = vmatpush1.msra.mxu0 0.0
        %674 = vmatprep.subr.mxu0 0.0
        %675 = vmatpush1.msra.mxu0 0.0
        %676 = vmatprep.subr.mxu0 0.0
        %677 = vmatpush1.msra.mxu0 0.0
        %678 = vmatprep.subr.mxu0 0.0
        %679 = vmatpush1.msra.mxu0 0.0
        %680 = vmatprep.subr.mxu0 0.0
        %681 = vmatpush1.msra.mxu0 0.0
        %682 = vmatprep.subr.mxu0 0.0
        %683 = vmatpush1.msra.mxu0 0.0
        %684 = vmatprep.subr.mxu0 0.0
        %685 = vmatpush1.msra.mxu0 0.0
        %686 = vmatprep.subr.mxu0 0.0
        %687 = vmatpush1.msra.mxu0 0.0
        %688 = vmatprep.subr.mxu0 0.0
        %689 = vmatpush1.msra.mxu0 0.0
        %690 = vmatprep.subr.mxu0 0.0
        %691 = vmatpush1.msra.mxu0 0.0
        %692 = vmatprep.mubr.f32.mxu0 0.0
        %693 = vmatmul.mubr.f32.gmra.mrb[0].mxu0 %v623
        %v694 = vpop.f32.mrb[0].mxu0
        %v695 = vadd.f32 %v614, %v694
        %v696 = vpop.f32.mrb[0].mxu0
        %697 = vmatprep.mubr.f32.mxu0 0.0
        %698 = vmatmul.mubr.f32.gmra.mrb[0].mxu0 %v626
        %v699 = vpop.f32.mrb[0].mxu0
        %v700 = vadd.f32 %v619, %v699
        %v701 = vpop.f32.mrb[0].mxu0
        %702 = vdwg.mxu0
        %v703 = vmul.f32 %v695, %v317
        %v704 = vmul.f32 %v700, %v317
        %v705 = vadd.f32 %v703, %v324
        %v706 = vadd.f32 %v704, %v324
        %s707 = scalar_lea.vmem %s230, 16 [#allocation8]
        %708 = vst [vmem:[%s707] sm:$0xff] %v705
        %709 = vst [vmem:[%s707 + $0x8] sm:$0xff] %v706
        %s710 = sand.u32 %s119, 1
        %s711 = scalar_lea.sflag [#allocation5], %s710
        %s712 = sand.u32 %s119, 1
        %s713 = smul.addr %s712, 32
        %s714 = scalar_lea.vmem [#allocation8], %s713
        // Predicated region
        $region45: #{tpu_custom_call.1} parent=35 // pred_check
          %p715 = pneg %p129
        $region46: #{tpu_custom_call.1} parent=35 // pred_check_branch
          %717 = sbr.rel (%p715) target = $region48
        $region47: #{tpu_custom_call.1} parent=35 // pred_region
          %s719 = ssub.s32 512, 512
          %720 = vsyncadd %s711, %s719
          %s721 = smul.addr %s22, 4
          %s722 = smul.addr %s721, 128
          %s723 = scalar_lea.hbm %s4, %s722
          %s724 = sshll.u32 %s714, 4
          %s725 = int_to_ptr.vmem [resolvable:$true] %s724
          %730 = dma.vmem_to_hbm [thread:$0]  %s725, 512, %s723, %s711, 128, 128, 8
        $region48: #{tpu_custom_call.1} parent=35 // pred_fallthru
          _
      $region36: #{tpu_custom_call.1} parent=5 // pred_fallthru
        _
      %p731 = scmp.le.s32.totalorder 2, %s17
      // Predicated region
      $region49: #{tpu_custom_call.1} parent=5 // pred_check
        %p732 = pneg %p731
      $region50: #{tpu_custom_call.1} parent=5 // pred_check_branch
        %734 = sbr.rel (%p732) target = $region52
      $region51: #{tpu_custom_call.1} parent=5 // pred_region
        %s735 = ssub.s32 %s17, 2
        // Predicated region
        $region53: #{tpu_custom_call.1} parent=51 // pred_check
          %p736 = pneg %p135
        $region54: #{tpu_custom_call.1} parent=51 // pred_check_branch
          %738 = sbr.rel (%p736) target = $region56
        $region55: #{tpu_custom_call.1} parent=51 // pred_region
          %s739 = sand.u32 %s120, 1
          %s740 = scalar_lea.sflag [#allocation5], %s739
          %s741 = sand.u32 %s120, 1
          %s742 = smul.addr %s741, 32
          %s743 = scalar_lea.vmem [#allocation8], %s742
          %744 = dma.done %s740, 512
        $region56: #{tpu_custom_call.1} parent=51 // pred_fallthru
          _
      $region52: #{tpu_custom_call.1} parent=5 // pred_fallthru
        _
    $region6: #{tpu_custom_call.1} parent=1 // loop_footer
      %s21 = sadd.s32 1, %s17
    $region7: #{tpu_custom_call.1} parent=1 // loop_footer_branch
      %16 = sbr.rel target = $region3
    $region8: #{tpu_custom_call.1} parent=1 // loop_exit
      _
    %745 = vsyncpa [#allocation4], 1
    %s746 = scalar_lea.sflag [#allocation4], 1
    %747 = vsyncpa %s746, 1
    %748 = vsyncpa [#allocation7], 1
    %749 = vsyncpa [#allocation5], 1
    %s750 = scalar_lea.sflag [#allocation5], 1
    %751 = vsyncpa %s750, 1

</llo_original>
